<compile_context>
chip_gen: v5e
topology: v5e:2x2
jax: 0.10.0
libtpu: 0.0.40
codegen_flags: <defaults>
</compile_context>

<pallas_src>
import jax
import jax.numpy as jnp
from jax.experimental import pallas as pl
from jax.experimental.pallas import tpu as pltpu


def _round_up(n, m):
    return ((n + m - 1) // m) * m


def _pad2(x, rows, cols):
    r, c = x.shape
    return jnp.pad(x, ((0, rows - r), (0, cols - c)))


# --------------------------------------------------------------------------- #
# Kernel                                                                      #
# --------------------------------------------------------------------------- #
def _make_encoder_kernel(n_hidden_layers, num_domains, compute_dtype):
    """Fused MLP encoder.

    Ref order:
      img_ref, cond_ref,
      w1_img, w1_cond, b1,                    # layer 0 (Linear + ReLU)
      (w_i, b_i) * (n_hidden_layers - 1),     # remaining hidden Linear + ReLU
      w_head, b_head,                         # fused [mu | logvar] head
      out_ref                                 # (Bblk, 2 * z_pad) f32
    """

    def kernel(img_ref, cond_ref, *rest):
        out_ref = rest[-1]
        w_refs = rest[:-1]

        w1_img, w1_cond, b1 = w_refs[0], w_refs[1], w_refs[2]

        # ---- condition + bias accumulator (VPU), independent of the MXU ----- #
        # This chain has no data dependence on the image matmul, so the LLO
        # scheduler can overlap it with the MXU push/drain below.
        cond = cond_ref[...]                   # (B, num_domains) f32
        wc = w1_cond[...]                      # (num_domains, H1_pad) f32
        bias_acc = b1[...]                     # (1, H1_pad) f32 -> broadcasts
        for d in range(num_domains):           # static unroll, K is tiny
            bias_acc = bias_acc + cond[:, d:d + 1] * wc[d:d + 1, :]

        # ---- layer 0: images @ W1_img on the MXU (bf16 in, f32 acc) --------- #
        h = jnp.dot(img_ref[...], w1_img[...],
                    preferred_element_type=jnp.float32)
        h = jnp.maximum(h + bias_acc, 0.0)

        # ---- remaining hidden Linear + ReLU layers -------------------------- #
        idx = 3
        for _ in range(n_hidden_layers - 1):
            w, b = w_refs[idx], w_refs[idx + 1]
            idx += 2
            h = jnp.maximum(
                jnp.dot(h.astype(compute_dtype), w[...],
                        preferred_element_type=jnp.float32) + b[...],
                0.0)

        # ---- fused [mu | logvar] head: one MXU push, lane-dense store ------- #
        w_head, b_head = w_refs[idx], w_refs[idx + 1]
        out_ref[...] = jnp.dot(h.astype(compute_dtype), w_head[...],
                               preferred_element_type=jnp.float32) + b_head[...]

    return kernel


# --------------------------------------------------------------------------- #
# Parameter init (PyTorch-style, f32, weights stored as (in, out))            #
# --------------------------------------------------------------------------- #
def init_encoder_params(key, input_size, hidden_sizes, num_domains):
    params = []

    def linear(key, fan_in, fan_out):
        kw, kb = jax.random.split(key)
        bound = 1.0 / jnp.sqrt(jnp.float32(fan_in))
        w = jax.random.uniform(kw, (fan_in, fan_out), jnp.float32, -bound, bound)
        b = jax.random.uniform(kb, (1, fan_out), jnp.float32, -bound, bound)
        return w, b

    n_hidden = len(hidden_sizes) - 1
    keys = jax.random.split(key, n_hidden + 2)

    # layer 0: Linear(input_size + num_domains, hidden_sizes[0]) — split weight.
    w0, b0 = linear(keys[0], input_size + num_domains, hidden_sizes[0])
    params += [w0[:input_size, :], w0[input_size:, :], b0]

    for i in range(1, n_hidden):
        w, b = linear(keys[i], hidden_sizes[i - 1], hidden_sizes[i])
        params += [w, b]

    w_mu, b_mu = linear(keys[n_hidden], hidden_sizes[-2], hidden_sizes[-1])
    w_lv, b_lv = linear(keys[n_hidden + 1], hidden_sizes[-2], hidden_sizes[-1])
    params += [w_mu, b_mu, w_lv, b_lv]
    return params


# --------------------------------------------------------------------------- #
# Pack params ONCE: pad to lane multiples, fuse heads, cast to bf16           #
# (called at init, NOT per forward call)                                      #
# --------------------------------------------------------------------------- #
def pack_encoder_params(params, input_size, hidden_sizes, num_domains,
                        compute_dtype=jnp.bfloat16, lane=128):
    n_hidden = len(hidden_sizes) - 1
    z = hidden_sizes[-1]
    hp = [_round_up(h, lane) for h in hidden_sizes[:-1]]
    zp = _round_up(z, lane)

    w0i, w0c, b0 = params[0], params[1], params[2]
    packed = [
        _pad2(w0i, input_size, hp[0]).astype(compute_dtype),   # MXU operand
        _pad2(w0c, num_domains, hp[0]).astype(jnp.float32),    # VPU path stays f32
        _pad2(b0, 1, hp[0]).astype(jnp.float32),
    ]
    idx = 3
    for i in range(1, n_hidden):
        w, b = params[idx], params[idx + 1]
        idx += 2
        packed += [_pad2(w, hp[i - 1], hp[i]).astype(compute_dtype),
                   _pad2(b, 1, hp[i]).astype(jnp.float32)]

    w_mu, b_mu, w_lv, b_lv = params[idx], params[idx + 1], params[idx + 2], params[idx + 3]
    h_last = hp[-1]
    w_head = jnp.concatenate(
        [_pad2(w_mu, h_last, zp), _pad2(w_lv, h_last, zp)], axis=1
    ).astype(compute_dtype)                                     # (h_last, 2*zp)
    b_head = jnp.concatenate(
        [_pad2(b_mu, 1, zp), _pad2(b_lv, 1, zp)], axis=1
    ).astype(jnp.float32)                                       # (1, 2*zp)
    packed += [w_head, b_head]
    packed = [jax.device_put(p) for p in packed]
    return packed, hp, zp


# --------------------------------------------------------------------------- #
# Forward factory: returns a jitted forward(images, conditions, packed)       #
# --------------------------------------------------------------------------- #
def make_encoder_forward(input_size, hidden_sizes, num_domains,
                         compute_dtype=jnp.bfloat16, lane=128):
    n_hidden = len(hidden_sizes) - 1
    z = hidden_sizes[-1]
    hp = [_round_up(h, lane) for h in hidden_sizes[:-1]]
    zp = _round_up(z, lane)

    kernel = _make_encoder_kernel(n_hidden, num_domains, compute_dtype)

    @jax.jit
    def forward(images, conditions, packed):
        batch = images.shape[0]

        # bf16 packs 16 sublanes per vreg -> pad batch to a multiple of 16 so
        # the MXU LHS feed and f32->bf16 casts are unmasked.
        bp = _round_up(max(batch, 16), 16)
        # Grid-shape over the batch so large batches shard across v7x's two
        # TensorCores; at small bp this is a single grid point.
        batch_block = bp if bp <= 512 else 256
        bp = _round_up(bp, batch_block)

        img_p = jnp.pad(images, ((0, bp - batch), (0, 0))).astype(compute_dtype)
        cond_p = jnp.pad(conditions, ((0, bp - batch), (0, 0))).astype(jnp.float32)

        grid = (bp // batch_block,)
        in_specs = (
            [pl.BlockSpec((batch_block, input_size), lambda i: (i, 0)),
             pl.BlockSpec((batch_block, num_domains), lambda i: (i, 0))]
            + [pl.BlockSpec(p.shape, lambda i: (0, 0)) for p in packed]
        )
        out_spec = pl.BlockSpec((batch_block, 2 * zp), lambda i: (i, 0))

        flops = 2 * bp * (input_size * hp[0]
                          + sum(hp[i - 1] * hp[i] for i in range(1, n_hidden))
                          + hp[-1] * 2 * zp)
        bytes_accessed = (img_p.size * img_p.dtype.itemsize
                          + cond_p.size * cond_p.dtype.itemsize
                          + sum(p.size * p.dtype.itemsize for p in packed)
                          + bp * 2 * zp * 4)

        out = pl.pallas_call(
            kernel,
            out_shape=jax.ShapeDtypeStruct((bp, 2 * zp), jnp.float32),
            grid_spec=pltpu.PrefetchScalarGridSpec(
                num_scalar_prefetch=0,
                grid=grid,
                in_specs=in_specs,
                out_specs=out_spec),
            cost_estimate=pl.CostEstimate(flops=flops, transcendentals=0,
                                          bytes_accessed=bytes_accessed),
            compiler_params=pltpu.CompilerParams(
                dimension_semantics=("parallel",)),
        )(img_p, cond_p, *packed)

        mu = out[:batch, :z]
        logvar = out[:batch, zp:zp + z]
        return mu, logvar

    return forward


# --------------------------------------------------------------------------- #
# Pure-JAX reference (mirrors the PyTorch forward, same bf16 quantization)    #
# --------------------------------------------------------------------------- #
def encoder_forward_ref(images, conditions, params, hidden_sizes,
                        compute_dtype=jnp.bfloat16):
    hi = jax.lax.Precision.HIGHEST

    def q(x):  # same weight/activation quantization the kernel applies
        return x.astype(compute_dtype).astype(jnp.float32)

    n_hidden = len(hidden_sizes) - 1
    w0i, w0c, b0 = params[0], params[1], params[2]
    h = jnp.maximum(
        jnp.dot(q(images), q(w0i), precision=hi)
        + jnp.dot(conditions, w0c, precision=hi) + b0, 0.0)
    idx = 3
    for _ in range(n_hidden - 1):
        w, b = params[idx], params[idx + 1]
        idx += 2
        h = jnp.maximum(jnp.dot(q(h), q(w), precision=hi) + b, 0.0)
    w_mu, b_mu, w_lv, b_lv = params[idx], params[idx + 1], params[idx + 2], params[idx + 3]
    mu = jnp.dot(q(h), q(w_mu), precision=hi) + b_mu
    logvar = jnp.dot(q(h), q(w_lv), precision=hi) + b_lv
    return mu, logvar


if __name__ == "__main__":
    key = jax.random.PRNGKey(0)
    k_img, k_cond, k_params = jax.random.split(key, 3)

    # Small shapes consistent with the module's forward.
    batch, channels, height, width = 2, 4, 8, 8
    num_domains = 4
    input_size = channels * height * width          # M = 256
    hidden_sizes = [32, 32, 16]                     # two hidden ReLU layers -> z_dim 16

    images_nchw = jax.random.normal(k_img, (batch, channels, height, width),
                                    dtype=jnp.float32)
    images = images_nchw.reshape(batch, input_size)  # flatten NCHW row-major
    dom_ids = jax.random.randint(k_cond, (batch,), 0, num_domains)
    conditions = jax.nn.one_hot(dom_ids, num_domains, dtype=jnp.float32)

    # ---- init + pack ONCE (packing is not on the per-call path) ------------ #
    params = init_encoder_params(k_params, input_size, hidden_sizes, num_domains)
    packed, _, _ = pack_encoder_params(params, input_size, hidden_sizes,
                                       num_domains)
    encoder_forward = make_encoder_forward(input_size, hidden_sizes, num_domains)

    mu, logvar = encoder_forward(images, conditions, packed)
    mu = jax.block_until_ready(mu)
    logvar = jax.block_until_ready(logvar)

    mu_ref, logvar_ref = encoder_forward_ref(images, conditions, params,
                                             hidden_sizes)
    assert mu.shape == (batch, hidden_sizes[-1])
    assert logvar.shape == (batch, hidden_sizes[-1])
    assert jnp.allclose(mu, mu_ref, atol=1e-3, rtol=1e-3)
    assert jnp.allclose(logvar, logvar_ref, atol=1e-3, rtol=1e-3)

    print("KERNEL_OK")
</pallas_src>

<mosaic_0001>
module attributes {stable_mosaic.version = 11 : i64} {
  func.func @kernel(%arg0: i32, %arg1: memref<16x256xbf16, #tpu.memory_space<vmem>>, %arg2: memref<16x4xf32, #tpu.memory_space<vmem>>, %arg3: memref<256x128xbf16, #tpu.memory_space<vmem>>, %arg4: memref<4x128xf32, #tpu.memory_space<vmem>>, %arg5: memref<1x128xf32, #tpu.memory_space<vmem>>, %arg6: memref<128x128xbf16, #tpu.memory_space<vmem>>, %arg7: memref<1x128xf32, #tpu.memory_space<vmem>>, %arg8: memref<128x256xbf16, #tpu.memory_space<vmem>>, %arg9: memref<1x256xf32, #tpu.memory_space<vmem>>, %arg10: memref<16x256xf32, #tpu.memory_space<vmem>>) attributes {dimension_semantics = [#tpu.dimension_semantics<parallel>], iteration_bounds = array<i64: 1>, scalar_prefetch = 0 : i64, scratch_operands = 0 : i64, tpu.core_type = #tpu.core_type<tc>, window_params = [{transform_indices = @transform_0, window_bounds = array<i64: 16, 256>}, {transform_indices = @transform_1, window_bounds = array<i64: 16, 4>}, {pipeline_mode = #tpu.pipeline_mode<synchronous>, transform_indices = @transform_2, window_bounds = array<i64: 256, 128>}, {pipeline_mode = #tpu.pipeline_mode<synchronous>, transform_indices = @transform_3, window_bounds = array<i64: 4, 128>}, {pipeline_mode = #tpu.pipeline_mode<synchronous>, transform_indices = @transform_4, window_bounds = array<i64: 1, 128>}, {pipeline_mode = #tpu.pipeline_mode<synchronous>, transform_indices = @transform_5, window_bounds = array<i64: 128, 128>}, {pipeline_mode = #tpu.pipeline_mode<synchronous>, transform_indices = @transform_6, window_bounds = array<i64: 1, 128>}, {pipeline_mode = #tpu.pipeline_mode<synchronous>, transform_indices = @transform_7, window_bounds = array<i64: 128, 256>}, {pipeline_mode = #tpu.pipeline_mode<synchronous>, transform_indices = @transform_8, window_bounds = array<i64: 1, 256>}, {transform_indices = @transform_9, window_bounds = array<i64: 16, 256>}]} {
    %c0 = arith.constant 0 : index
    %c0_0 = arith.constant 0 : index
    %0 = vector.load %arg2[%c0, %c0_0] : memref<16x4xf32, #tpu.memory_space<vmem>>, vector<16x4xf32>
    %c0_1 = arith.constant 0 : index
    %c0_2 = arith.constant 0 : index
    %1 = vector.load %arg4[%c0_1, %c0_2] : memref<4x128xf32, #tpu.memory_space<vmem>>, vector<4x128xf32>
    %c0_3 = arith.constant 0 : index
    %c0_4 = arith.constant 0 : index
    %2 = vector.load %arg5[%c0_3, %c0_4] : memref<1x128xf32, #tpu.memory_space<vmem>>, vector<1x128xf32>
    %3 = vector.extract_strided_slice %0 {offsets = [0, 0], sizes = [16, 1], strides = [1, 1]} : vector<16x4xf32> to vector<16x1xf32>
    %4 = vector.extract_strided_slice %1 {offsets = [0, 0], sizes = [1, 128], strides = [1, 1]} : vector<4x128xf32> to vector<1x128xf32>
    %5 = vector.broadcast %3 : vector<16x1xf32> to vector<16x128xf32>
    %6 = vector.broadcast %4 : vector<1x128xf32> to vector<16x128xf32>
    %7 = arith.mulf %5, %6 : vector<16x128xf32>
    %8 = vector.broadcast %2 : vector<1x128xf32> to vector<16x128xf32>
    %9 = arith.addf %8, %7 : vector<16x128xf32>
    %10 = vector.extract_strided_slice %0 {offsets = [0, 1], sizes = [16, 1], strides = [1, 1]} : vector<16x4xf32> to vector<16x1xf32>
    %11 = vector.extract_strided_slice %1 {offsets = [1, 0], sizes = [1, 128], strides = [1, 1]} : vector<4x128xf32> to vector<1x128xf32>
    %12 = vector.broadcast %10 : vector<16x1xf32> to vector<16x128xf32>
    %13 = vector.broadcast %11 : vector<1x128xf32> to vector<16x128xf32>
    %14 = arith.mulf %12, %13 : vector<16x128xf32>
    %15 = arith.addf %9, %14 : vector<16x128xf32>
    %16 = vector.extract_strided_slice %0 {offsets = [0, 2], sizes = [16, 1], strides = [1, 1]} : vector<16x4xf32> to vector<16x1xf32>
    %17 = vector.extract_strided_slice %1 {offsets = [2, 0], sizes = [1, 128], strides = [1, 1]} : vector<4x128xf32> to vector<1x128xf32>
    %18 = vector.broadcast %16 : vector<16x1xf32> to vector<16x128xf32>
    %19 = vector.broadcast %17 : vector<1x128xf32> to vector<16x128xf32>
    %20 = arith.mulf %18, %19 : vector<16x128xf32>
    %21 = arith.addf %15, %20 : vector<16x128xf32>
    %22 = vector.extract_strided_slice %0 {offsets = [0, 3], sizes = [16, 1], strides = [1, 1]} : vector<16x4xf32> to vector<16x1xf32>
    %23 = vector.extract_strided_slice %1 {offsets = [3, 0], sizes = [1, 128], strides = [1, 1]} : vector<4x128xf32> to vector<1x128xf32>
    %24 = vector.broadcast %22 : vector<16x1xf32> to vector<16x128xf32>
    %25 = vector.broadcast %23 : vector<1x128xf32> to vector<16x128xf32>
    %26 = arith.mulf %24, %25 : vector<16x128xf32>
    %27 = arith.addf %21, %26 : vector<16x128xf32>
    %c0_5 = arith.constant 0 : index
    %c0_6 = arith.constant 0 : index
    %28 = vector.load %arg1[%c0_5, %c0_6] : memref<16x256xbf16, #tpu.memory_space<vmem>>, vector<16x256xbf16>
    %c0_7 = arith.constant 0 : index
    %c0_8 = arith.constant 0 : index
    %29 = vector.load %arg3[%c0_7, %c0_8] : memref<256x128xbf16, #tpu.memory_space<vmem>>, vector<256x128xbf16>
    %cst = arith.constant dense<0.000000e+00> : vector<16x128xf32>
    %30 = tpu.matmul %28, %29, %cst {dimension_numbers = #tpu.dot_dimension_numbers<[1], [0], [0], [1], [0, 0, 1, 1], [], []>} : vector<16x256xbf16>, vector<256x128xbf16>, vector<16x128xf32> -> vector<16x128xf32>
    %31 = arith.addf %30, %27 : vector<16x128xf32>
    %cst_9 = arith.constant 0.000000e+00 : f32
    %32 = vector.broadcast %cst_9 : f32 to vector<16x128xf32>
    %33 = arith.maximumf %31, %32 : vector<16x128xf32>
    %34 = arith.truncf %33 : vector<16x128xf32> to vector<16x128xbf16>
    %c0_10 = arith.constant 0 : index
    %c0_11 = arith.constant 0 : index
    %35 = vector.load %arg6[%c0_10, %c0_11] : memref<128x128xbf16, #tpu.memory_space<vmem>>, vector<128x128xbf16>
    %cst_12 = arith.constant dense<0.000000e+00> : vector<16x128xf32>
    %36 = tpu.matmul %34, %35, %cst_12 {dimension_numbers = #tpu.dot_dimension_numbers<[1], [0], [0], [1], [0, 0, 1, 1], [], []>} : vector<16x128xbf16>, vector<128x128xbf16>, vector<16x128xf32> -> vector<16x128xf32>
    %c0_13 = arith.constant 0 : index
    %c0_14 = arith.constant 0 : index
    %37 = vector.load %arg7[%c0_13, %c0_14] : memref<1x128xf32, #tpu.memory_space<vmem>>, vector<1x128xf32>
    %38 = vector.broadcast %37 : vector<1x128xf32> to vector<16x128xf32>
    %39 = arith.addf %36, %38 : vector<16x128xf32>
    %cst_15 = arith.constant 0.000000e+00 : f32
    %40 = vector.broadcast %cst_15 : f32 to vector<16x128xf32>
    %41 = arith.maximumf %39, %40 : vector<16x128xf32>
    %42 = arith.truncf %41 : vector<16x128xf32> to vector<16x128xbf16>
    %c0_16 = arith.constant 0 : index
    %c0_17 = arith.constant 0 : index
    %43 = vector.load %arg8[%c0_16, %c0_17] : memref<128x256xbf16, #tpu.memory_space<vmem>>, vector<128x256xbf16>
    %cst_18 = arith.constant dense<0.000000e+00> : vector<16x256xf32>
    %44 = tpu.matmul %42, %43, %cst_18 {dimension_numbers = #tpu.dot_dimension_numbers<[1], [0], [0], [1], [0, 0, 1, 1], [], []>} : vector<16x128xbf16>, vector<128x256xbf16>, vector<16x256xf32> -> vector<16x256xf32>
    %c0_19 = arith.constant 0 : index
    %c0_20 = arith.constant 0 : index
    %45 = vector.load %arg9[%c0_19, %c0_20] : memref<1x256xf32, #tpu.memory_space<vmem>>, vector<1x256xf32>
    %46 = vector.broadcast %45 : vector<1x256xf32> to vector<16x256xf32>
    %47 = arith.addf %44, %46 : vector<16x256xf32>
    %c0_21 = arith.constant 0 : index
    %c0_22 = arith.constant 0 : index
    %48 = vector.load %arg10[%c0_21, %c0_22] : memref<16x256xf32, #tpu.memory_space<vmem>>, vector<16x256xf32>
    tpu.vector_store %arg10[%c0_21, %c0_22], %47 {strides = array<i32>} : memref<16x256xf32, #tpu.memory_space<vmem>>, vector<16x256xf32>,
    return
  }
  func.func @transform_0(%arg0: i32) -> (i32, i32) {
    %c0_i32 = arith.constant 0 : i32
    %c0_i32_0 = arith.constant 0 : i32
    return %arg0, %c0_i32 : i32, i32
  }
  func.func @transform_1(%arg0: i32) -> (i32, i32) {
    %c0_i32 = arith.constant 0 : i32
    %c0_i32_0 = arith.constant 0 : i32
    return %arg0, %c0_i32 : i32, i32
  }
  func.func @transform_2(%arg0: i32) -> (i32, i32) {
    %c0_i32 = arith.constant 0 : i32
    %c0_i32_0 = arith.constant 0 : i32
    %c0_i32_1 = arith.constant 0 : i32
    return %c0_i32, %c0_i32_0 : i32, i32
  }
  func.func @transform_3(%arg0: i32) -> (i32, i32) {
    %c0_i32 = arith.constant 0 : i32
    %c0_i32_0 = arith.constant 0 : i32
    %c0_i32_1 = arith.constant 0 : i32
    return %c0_i32, %c0_i32_0 : i32, i32
  }
  func.func @transform_4(%arg0: i32) -> (i32, i32) {
    %c0_i32 = arith.constant 0 : i32
    %c0_i32_0 = arith.constant 0 : i32
    %c0_i32_1 = arith.constant 0 : i32
    return %c0_i32, %c0_i32_0 : i32, i32
  }
  func.func @transform_5(%arg0: i32) -> (i32, i32) {
    %c0_i32 = arith.constant 0 : i32
    %c0_i32_0 = arith.constant 0 : i32
    %c0_i32_1 = arith.constant 0 : i32
    return %c0_i32, %c0_i32_0 : i32, i32
  }
  func.func @transform_6(%arg0: i32) -> (i32, i32) {
    %c0_i32 = arith.constant 0 : i32
    %c0_i32_0 = arith.constant 0 : i32
    %c0_i32_1 = arith.constant 0 : i32
    return %c0_i32, %c0_i32_0 : i32, i32
  }
  func.func @transform_7(%arg0: i32) -> (i32, i32) {
    %c0_i32 = arith.constant 0 : i32
    %c0_i32_0 = arith.constant 0 : i32
    %c0_i32_1 = arith.constant 0 : i32
    return %c0_i32, %c0_i32_0 : i32, i32
  }
  func.func @transform_8(%arg0: i32) -> (i32, i32) {
    %c0_i32 = arith.constant 0 : i32
    %c0_i32_0 = arith.constant 0 : i32
    %c0_i32_1 = arith.constant 0 : i32
    return %c0_i32, %c0_i32_0 : i32, i32
  }
  func.func @transform_9(%arg0: i32) -> (i32, i32) {
    %c0_i32 = arith.constant 0 : i32
    %c0_i32_0 = arith.constant 0 : i32
    return %arg0, %c0_i32 : i32, i32
  }
}

</mosaic_0001>

<llo_original>
// kernel: forward.1
$region0: #{forward.1}
  #allocation0 [shape = 'u32[]', space=smem, size = 0x4, offset = 0x4, fixed_abs, tag = 'smem constant byte address 0x4 - core index']
  #allocation1 [shape = 'u32[72,128]{1,0:T(1,128)}', space=vmem, size = 0x9000, scoped, tag = 'internal scratch']
  %s0 = inlined_call_operand.vmem [shape: bf16[16,256], index: 0, kind: input, shape index: {}]
  %s1 = inlined_call_operand.vmem [shape: f32[16,4], index: 1, kind: input, shape index: {}]
  %s2 = inlined_call_operand.hbm [shape: bf16[256,128], index: 2, kind: input, shape index: {}]
  %s3 = inlined_call_operand.vmem [shape: f32[4,128], index: 3, kind: input, shape index: {}]
  %s4 = inlined_call_operand.vmem [shape: f32[1,128], index: 4, kind: input, shape index: {}]
  %s5 = inlined_call_operand.hbm [shape: bf16[128,128], index: 5, kind: input, shape index: {}]
  %s6 = inlined_call_operand.vmem [shape: f32[1,128], index: 6, kind: input, shape index: {}]
  %s7 = inlined_call_operand.hbm [shape: bf16[128,256], index: 7, kind: input, shape index: {}]
  %s8 = inlined_call_operand.vmem [shape: f32[1,256], index: 8, kind: input, shape index: {}]
  %s9 = inlined_call_operand.vmem [shape: f32[16,256], index: 9, kind: output, shape index: {}]
  %s10 = sld [smem:[#allocation0]]
  $region58: #{forward.1} parent=0
    _
  %s12 = ssub.s32 1, %s10
  %s13 = scalar_select 0, %s12, %s10
  $region1: #{forward.1} parent=0
    #allocation2 [shape = 'u8[65536]{0}', space=vmem, size = 0x10000, scoped, tag = 'input window, operand 2, single buffered']
    #allocation3 [shape = 's32[1]{0}', space=sflag, size = 0x4, scoped, tag = 'scoped memory for forward.1']
    #allocation4 [shape = 'u8[32768]{0}', space=vmem, size = 0x8000, scoped, tag = 'input window, operand 5, single buffered']
    #allocation5 [shape = 's32[1]{0}', space=sflag, size = 0x4, scoped, tag = 'scoped memory for forward.1']
    #allocation6 [shape = 'u8[65536]{0}', space=vmem, size = 0x10000, scoped, tag = 'input window, operand 7, single buffered']
    %14 = vsyncpa [#allocation3], 0
    %15 = vsyncpa [#allocation5], 0
    // Predicated region
    $region2: #{forward.1} parent=1 // pred_check
      _
    $region3: #{forward.1} parent=1 // pred_check_branch
      %17 = sbr.rel (0) target = $region5
    $region4: #{forward.1} parent=1 // pred_region
      _
    $region5: #{forward.1} parent=1 // pred_fallthru
      _
    // Predicated region
    $region6: #{forward.1} parent=1 // pred_check
      _
    $region7: #{forward.1} parent=1 // pred_check_branch
      %19 = sbr.rel (0) target = $region9
    $region8: #{forward.1} parent=1 // pred_region
      _
    $region9: #{forward.1} parent=1 // pred_fallthru
      _
    // Predicated region
    $region10: #{forward.1} parent=1 // pred_check
      _
    $region11: #{forward.1} parent=1 // pred_check_branch
      %21 = sbr.rel (0) target = $region13
    $region12: #{forward.1} parent=1 // pred_region
      %23 = vsyncadd [#allocation3], 0
      %s24 = sshll.u32 %s2, 4
      %s25 = int_to_ptr.hbm [resolvable:$true] %s24
      %s26 = sshll.u32 [#allocation2], 4
      %s27 = int_to_ptr.vmem [resolvable:$true] %s26
      %32 = dma.hbm_to_vmem [thread:$0]  %s25, 2048, %s27, [#allocation3], 64, 64, 4
    $region13: #{forward.1} parent=1 // pred_fallthru
      _
    // Predicated region
    $region14: #{forward.1} parent=1 // pred_check
      _
    $region15: #{forward.1} parent=1 // pred_check_branch
      %34 = sbr.rel (0) target = $region17
    $region16: #{forward.1} parent=1 // pred_region
      _
    $region17: #{forward.1} parent=1 // pred_fallthru
      _
    // Predicated region
    $region18: #{forward.1} parent=1 // pred_check
      _
    $region19: #{forward.1} parent=1 // pred_check_branch
      %36 = sbr.rel (0) target = $region21
    $region20: #{forward.1} parent=1 // pred_region
      _
    $region21: #{forward.1} parent=1 // pred_fallthru
      _
    // Predicated region
    $region22: #{forward.1} parent=1 // pred_check
      _
    $region23: #{forward.1} parent=1 // pred_check_branch
      %38 = sbr.rel (0) target = $region25
    $region24: #{forward.1} parent=1 // pred_region
      %40 = vsyncadd [#allocation5], 0
      %s41 = sshll.u32 %s5, 4
      %s42 = int_to_ptr.hbm [resolvable:$true] %s41
      %s43 = sshll.u32 [#allocation4], 4
      %s44 = int_to_ptr.vmem [resolvable:$true] %s43
      %49 = dma.hbm_to_vmem [thread:$0]  %s42, 1024, %s44, [#allocation5], 64, 64, 4
    $region25: #{forward.1} parent=1 // pred_fallthru
      _
    // Predicated region
    $region26: #{forward.1} parent=1 // pred_check
      _
    $region27: #{forward.1} parent=1 // pred_check_branch
      %51 = sbr.rel (0) target = $region29
    $region28: #{forward.1} parent=1 // pred_region
      _
    $region29: #{forward.1} parent=1 // pred_fallthru
      _
    // Predicated region
    $region30: #{forward.1} parent=1 // pred_check
      _
    $region31: #{forward.1} parent=1 // pred_check_branch
      %53 = sbr.rel (0) target = $region33
    $region32: #{forward.1} parent=1 // pred_region
      %55 = vsyncadd [#allocation5], 0
      %s56 = sshll.u32 %s7, 4
      %s57 = int_to_ptr.hbm [resolvable:$true] %s56
      %s58 = sshll.u32 [#allocation6], 4
      %s59 = int_to_ptr.vmem [resolvable:$true] %s58
      %64 = dma.hbm_to_vmem [thread:$0]  %s57, 2048, %s59, [#allocation5], 128, 128, 8
    $region33: #{forward.1} parent=1 // pred_fallthru
      _
    // Predicated region
    $region34: #{forward.1} parent=1 // pred_check
      _
    $region35: #{forward.1} parent=1 // pred_check_branch
      %66 = sbr.rel (0) target = $region37
    $region36: #{forward.1} parent=1 // pred_region
      _
    $region37: #{forward.1} parent=1 // pred_fallthru
      _
    // Predicated region
    $region38: #{forward.1} parent=1 // pred_check
      _
    $region39: #{forward.1} parent=1 // pred_check_branch
      %68 = sbr.rel (0) target = $region41
    $region40: #{forward.1} parent=1 // pred_region
      %70 = dma.done [#allocation3], 2048
    $region41: #{forward.1} parent=1 // pred_fallthru
      _
    // Predicated region
    $region42: #{forward.1} parent=1 // pred_check
      _
    $region43: #{forward.1} parent=1 // pred_check_branch
      %72 = sbr.rel (0) target = $region45
    $region44: #{forward.1} parent=1 // pred_region
      %74 = dma.done [#allocation5], 1024
    $region45: #{forward.1} parent=1 // pred_fallthru
      _
    // Predicated region
    $region46: #{forward.1} parent=1 // pred_check
      _
    $region47: #{forward.1} parent=1 // pred_check_branch
      %76 = sbr.rel (0) target = $region49
    $region48: #{forward.1} parent=1 // pred_region
      %78 = dma.done [#allocation5], 2048
    $region49: #{forward.1} parent=1 // pred_fallthru
      _
    %v79 = vld [vmem:[%s1] sm:$0xff]
    %v80 = vld [vmem:[%s1 + $0x8] sm:$0xff]
    %v81 = vld [vmem:[%s3] sm:$0xf]
    %v82 = vld [vmem:[%s4] sm:$0x1]
    %84 = vset.pattern.permute.xlu0 0
    %85 = vperm.xlu0 %84, %v79
    %v86 = vpop.permute.xlu0 %85
    %89 = vset.pattern.permute.xlu0 0
    %90 = vperm.xlu0 %89, %v80
    %v91 = vpop.permute.xlu0 %90
    %v93 = vperm.slane %v81, 0
    %v94 = vmul.f32 %v86, %v93
    %v95 = vmul.f32 %v91, %v93
    %v97 = vperm.slane %v82, 0
    %v99 = vadd.f32 %v97, %v94
    %v100 = vadd.f32 %v97, %v95
    %101 = vset.pattern.permute.xlu0 1
    %102 = vperm.xlu0 %101, %v79
    %v103 = vpop.permute.xlu0 %102
    %105 = vset.pattern.permute.xlu0 1
    %106 = vperm.xlu0 %105, %v80
    %v107 = vpop.permute.xlu0 %106
    %v109 = vperm.slane %v81, 1
    %v110 = vmul.f32 %v103, %v109
    %v111 = vmul.f32 %v107, %v109
    %v112 = vadd.f32 %v99, %v110
    %v113 = vadd.f32 %v100, %v111
    %114 = vset.pattern.permute.xlu0 2
    %115 = vperm.xlu0 %114, %v79
    %v116 = vpop.permute.xlu0 %115
    %118 = vset.pattern.permute.xlu0 2
    %119 = vperm.xlu0 %118, %v80
    %v120 = vpop.permute.xlu0 %119
    %v122 = vperm.slane %v81, 2
    %v123 = vmul.f32 %v116, %v122
    %v124 = vmul.f32 %v120, %v122
    %v125 = vadd.f32 %v112, %v123
    %v126 = vadd.f32 %v113, %v124
    %127 = vset.pattern.permute.xlu0 3
    %128 = vperm.xlu0 %127, %v79
    %v129 = vpop.permute.xlu0 %128
    %131 = vset.pattern.permute.xlu0 3
    %132 = vperm.xlu0 %131, %v80
    %v133 = vpop.permute.xlu0 %132
    %v135 = vperm.slane %v81, 3
    %v136 = vmul.f32 %v129, %v135
    %v137 = vmul.f32 %v133, %v135
    %v138 = vadd.f32 %v125, %v136
    %v139 = vadd.f32 %v126, %v137
    %v140 = vld [vmem:[%s0] sm:$0xff]
    %v141 = vld [vmem:[%s0 + $0x8] sm:$0xff]
    %v142 = vld [vmem:[#allocation2] sm:$0xf]
    %v143 = vld [vmem:[#allocation2 + $0x4] sm:$0xf]
    %v144 = vld [vmem:[#allocation2 + $0x8] sm:$0xf]
    %v145 = vld [vmem:[#allocation2 + $0xc] sm:$0xf]
    %v146 = vld [vmem:[#allocation2 + $0x10] sm:$0xf]
    %v147 = vld [vmem:[#allocation2 + $0x14] sm:$0xf]
    %v148 = vld [vmem:[#allocation2 + $0x18] sm:$0xf]
    %v149 = vld [vmem:[#allocation2 + $0x1c] sm:$0xf]
    %v150 = vld [vmem:[#allocation2 + $0x20] sm:$0xf]
    %v151 = vld [vmem:[#allocation2 + $0x24] sm:$0xf]
    %v152 = vld [vmem:[#allocation2 + $0x28] sm:$0xf]
    %v153 = vld [vmem:[#allocation2 + $0x2c] sm:$0xf]
    %v154 = vld [vmem:[#allocation2 + $0x30] sm:$0xf]
    %v155 = vld [vmem:[#allocation2 + $0x34] sm:$0xf]
    %v156 = vld [vmem:[#allocation2 + $0x38] sm:$0xf]
    %v157 = vld [vmem:[#allocation2 + $0x3c] sm:$0xf]
    %v158 = vld [vmem:[#allocation2 + $0x40] sm:$0xf]
    %v159 = vld [vmem:[#allocation2 + $0x44] sm:$0xf]
    %v160 = vld [vmem:[#allocation2 + $0x48] sm:$0xf]
    %v161 = vld [vmem:[#allocation2 + $0x4c] sm:$0xf]
    %v162 = vld [vmem:[#allocation2 + $0x50] sm:$0xf]
    %v163 = vld [vmem:[#allocation2 + $0x54] sm:$0xf]
    %v164 = vld [vmem:[#allocation2 + $0x58] sm:$0xf]
    %v165 = vld [vmem:[#allocation2 + $0x5c] sm:$0xf]
    %v166 = vld [vmem:[#allocation2 + $0x60] sm:$0xf]
    %v167 = vld [vmem:[#allocation2 + $0x64] sm:$0xf]
    %v168 = vld [vmem:[#allocation2 + $0x68] sm:$0xf]
    %v169 = vld [vmem:[#allocation2 + $0x6c] sm:$0xf]
    %v170 = vld [vmem:[#allocation2 + $0x70] sm:$0xf]
    %v171 = vld [vmem:[#allocation2 + $0x74] sm:$0xf]
    %v172 = vld [vmem:[#allocation2 + $0x78] sm:$0xf]
    %v173 = vld [vmem:[#allocation2 + $0x7c] sm:$0xf]
    %v176 = vunpack.c.l.b16 %v140
    %v177 = vunpack.c.h.b16 %v140
    %v178 = vunpack.c.l.b16 %v141
    %v179 = vunpack.c.h.b16 %v141
    %v180 = vpack.c.b16 %v178, %v176
    %v181 = vpack.c.b16 %v179, %v177
    %v216 = vunpack.c.l.b16 %v142
    %v217 = vunpack.c.l.b16 %v143
    %v218 = vunpack.c.l.b16 %v144
    %v219 = vunpack.c.l.b16 %v145
    %v220 = vunpack.c.l.b16 %v146
    %v221 = vunpack.c.l.b16 %v147
    %v222 = vunpack.c.l.b16 %v148
    %v223 = vunpack.c.l.b16 %v149
    %v224 = vunpack.c.l.b16 %v150
    %v225 = vunpack.c.l.b16 %v151
    %v226 = vunpack.c.l.b16 %v152
    %v227 = vunpack.c.l.b16 %v153
    %v228 = vunpack.c.l.b16 %v154
    %v229 = vunpack.c.l.b16 %v155
    %v230 = vunpack.c.l.b16 %v156
    %v231 = vunpack.c.l.b16 %v157
    %v232 = vunpack.c.l.b16 %v158
    %v233 = vunpack.c.l.b16 %v159
    %v234 = vunpack.c.l.b16 %v160
    %v235 = vunpack.c.l.b16 %v161
    %v236 = vunpack.c.l.b16 %v162
    %v237 = vunpack.c.l.b16 %v163
    %v238 = vunpack.c.l.b16 %v164
    %v239 = vunpack.c.l.b16 %v165
    %v240 = vunpack.c.l.b16 %v166
    %v241 = vunpack.c.l.b16 %v167
    %v242 = vunpack.c.l.b16 %v168
    %v243 = vunpack.c.l.b16 %v169
    %v244 = vunpack.c.l.b16 %v170
    %v245 = vunpack.c.l.b16 %v171
    %v246 = vunpack.c.l.b16 %v172
    %v247 = vunpack.c.l.b16 %v173
    %v248 = vpack.c.b16 %v217, %v216
    %v249 = vpack.c.b16 %v219, %v218
    %v250 = vpack.c.b16 %v221, %v220
    %v251 = vpack.c.b16 %v223, %v222
    %v252 = vpack.c.b16 %v225, %v224
    %v253 = vpack.c.b16 %v227, %v226
    %v254 = vpack.c.b16 %v229, %v228
    %v255 = vpack.c.b16 %v231, %v230
    %v256 = vpack.c.b16 %v233, %v232
    %v257 = vpack.c.b16 %v235, %v234
    %v258 = vpack.c.b16 %v237, %v236
    %v259 = vpack.c.b16 %v239, %v238
    %v260 = vpack.c.b16 %v241, %v240
    %v261 = vpack.c.b16 %v243, %v242
    %v262 = vpack.c.b16 %v245, %v244
    %v263 = vpack.c.b16 %v247, %v246
    %280 = vmatpush.bf16.msra.mxu0 %v255
    %281 = vmatpush.bf16.msra.mxu0 %v254
    %282 = vmatpush.bf16.msra.mxu0 %v253
    %283 = vmatpush.bf16.msra.mxu0 %v252
    %284 = vmatpush.bf16.msra.mxu0 %v251
    %285 = vmatpush.bf16.msra.mxu0 %v250
    %286 = vmatpush.bf16.msra.mxu0 %v249
    %287 = vmatpush.bf16.msra.mxu0 %v248
    %288 = vmatmul.bf16.gmra.mxu0 %v180
    %v289 = vpop.f32.mrf.mxu0
    %v290 = vadd.f32 %v138, %v289
    %v291 = vpop.f32.mrf.mxu0
    %v292 = vadd.f32 %v139, %v291
    %293 = vdwg.mxu0
    %294 = vmatpush.bf16.msra.mxu0 %v263
    %295 = vmatpush.bf16.msra.mxu0 %v262
    %296 = vmatpush.bf16.msra.mxu0 %v261
    %297 = vmatpush.bf16.msra.mxu0 %v260
    %298 = vmatpush.bf16.msra.mxu0 %v259
    %299 = vmatpush.bf16.msra.mxu0 %v258
    %300 = vmatpush.bf16.msra.mxu0 %v257
    %301 = vmatpush.bf16.msra.mxu0 %v256
    %302 = vmatmul.bf16.gmra.mxu0 %v181
    %v303 = vpop.f32.mrf.mxu0
    %v304 = vadd.f32 %v290, %v303
    %v305 = vpop.f32.mrf.mxu0
    %v306 = vadd.f32 %v292, %v305
    %307 = vdwg.mxu0
    %v308 = vmax.f32 %v304, 0.0
    %v309 = vmax.f32 %v306, 0.0
    %v310 = vpack.c.bf16 %v309, %v308
    %v311 = vld [vmem:[#allocation4] sm:$0xf]
    %v312 = vld [vmem:[#allocation4 + $0x4] sm:$0xf]
    %v313 = vld [vmem:[#allocation4 + $0x8] sm:$0xf]
    %v314 = vld [vmem:[#allocation4 + $0xc] sm:$0xf]
    %v315 = vld [vmem:[#allocation4 + $0x10] sm:$0xf]
    %v316 = vld [vmem:[#allocation4 + $0x14] sm:$0xf]
    %v317 = vld [vmem:[#allocation4 + $0x18] sm:$0xf]
    %v318 = vld [vmem:[#allocation4 + $0x1c] sm:$0xf]
    %v319 = vld [vmem:[#allocation4 + $0x20] sm:$0xf]
    %v320 = vld [vmem:[#allocation4 + $0x24] sm:$0xf]
    %v321 = vld [vmem:[#allocation4 + $0x28] sm:$0xf]
    %v322 = vld [vmem:[#allocation4 + $0x2c] sm:$0xf]
    %v323 = vld [vmem:[#allocation4 + $0x30] sm:$0xf]
    %v324 = vld [vmem:[#allocation4 + $0x34] sm:$0xf]
    %v325 = vld [vmem:[#allocation4 + $0x38] sm:$0xf]
    %v326 = vld [vmem:[#allocation4 + $0x3c] sm:$0xf]
    %v327 = vld [vmem:[%s6] sm:$0x1]
    %v329 = vperm.slane %v327, 0
    %v347 = vunpack.c.l.b16 %v311
    %v348 = vunpack.c.l.b16 %v312
    %v349 = vunpack.c.l.b16 %v313
    %v350 = vunpack.c.l.b16 %v314
    %v351 = vunpack.c.l.b16 %v315
    %v352 = vunpack.c.l.b16 %v316
    %v353 = vunpack.c.l.b16 %v317
    %v354 = vunpack.c.l.b16 %v318
    %v355 = vunpack.c.l.b16 %v319
    %v356 = vunpack.c.l.b16 %v320
    %v357 = vunpack.c.l.b16 %v321
    %v358 = vunpack.c.l.b16 %v322
    %v359 = vunpack.c.l.b16 %v323
    %v360 = vunpack.c.l.b16 %v324
    %v361 = vunpack.c.l.b16 %v325
    %v362 = vunpack.c.l.b16 %v326
    %v363 = vpack.c.b16 %v348, %v347
    %v364 = vpack.c.b16 %v350, %v349
    %v365 = vpack.c.b16 %v352, %v351
    %v366 = vpack.c.b16 %v354, %v353
    %v367 = vpack.c.b16 %v356, %v355
    %v368 = vpack.c.b16 %v358, %v357
    %v369 = vpack.c.b16 %v360, %v359
    %v370 = vpack.c.b16 %v362, %v361
    %379 = vmatpush.bf16.msra.mxu0 %v370
    %380 = vmatpush.bf16.msra.mxu0 %v369
    %381 = vmatpush.bf16.msra.mxu0 %v368
    %382 = vmatpush.bf16.msra.mxu0 %v367
    %383 = vmatpush.bf16.msra.mxu0 %v366
    %384 = vmatpush.bf16.msra.mxu0 %v365
    %385 = vmatpush.bf16.msra.mxu0 %v364
    %386 = vmatpush.bf16.msra.mxu0 %v363
    %387 = vmatmul.bf16.gmra.mxu0 %v310
    %v388 = vpop.f32.mrf.mxu0
    %v389 = vadd.f32 %v329, %v388
    %v390 = vpop.f32.mrf.mxu0
    %v391 = vadd.f32 %v329, %v390
    %392 = vdwg.mxu0
    %v393 = vmax.f32 %v389, 0.0
    %v394 = vmax.f32 %v391, 0.0
    %v395 = vpack.c.bf16 %v394, %v393
    %v396 = vld [vmem:[#allocation6] sm:$0xff]
    %v397 = vld [vmem:[#allocation6 + $0x8] sm:$0xff]
    %v398 = vld [vmem:[#allocation6 + $0x10] sm:$0xff]
    %v399 = vld [vmem:[#allocation6 + $0x18] sm:$0xff]
    %v400 = vld [vmem:[#allocation6 + $0x20] sm:$0xff]
    %v401 = vld [vmem:[#allocation6 + $0x28] sm:$0xff]
    %v402 = vld [vmem:[#allocation6 + $0x30] sm:$0xff]
    %v403 = vld [vmem:[#allocation6 + $0x38] sm:$0xff]
    %v404 = vld [vmem:[#allocation6 + $0x40] sm:$0xff]
    %v405 = vld [vmem:[#allocation6 + $0x48] sm:$0xff]
    %v406 = vld [vmem:[#allocation6 + $0x50] sm:$0xff]
    %v407 = vld [vmem:[#allocation6 + $0x58] sm:$0xff]
    %v408 = vld [vmem:[#allocation6 + $0x60] sm:$0xff]
    %v409 = vld [vmem:[#allocation6 + $0x68] sm:$0xff]
    %v410 = vld [vmem:[#allocation6 + $0x70] sm:$0xff]
    %v411 = vld [vmem:[#allocation6 + $0x78] sm:$0xff]
    %v412 = vld [vmem:[%s8] sm:$0x3]
    %v414 = vperm.slane %v412, 0
    %v415 = vperm.slane %v412, 1
    %v434 = vunpack.c.l.b16 %v396
    %v435 = vunpack.c.h.b16 %v396
    %v436 = vunpack.c.l.b16 %v397
    %v437 = vunpack.c.h.b16 %v397
    %v438 = vunpack.c.l.b16 %v398
    %v439 = vunpack.c.h.b16 %v398
    %v440 = vunpack.c.l.b16 %v399
    %v441 = vunpack.c.h.b16 %v399
    %v442 = vunpack.c.l.b16 %v400
    %v443 = vunpack.c.h.b16 %v400
    %v444 = vunpack.c.l.b16 %v401
    %v445 = vunpack.c.h.b16 %v401
    %v446 = vunpack.c.l.b16 %v402
    %v447 = vunpack.c.h.b16 %v402
    %v448 = vunpack.c.l.b16 %v403
    %v449 = vunpack.c.h.b16 %v403
    %v450 = vunpack.c.l.b16 %v404
    %v451 = vunpack.c.h.b16 %v404
    %v452 = vunpack.c.l.b16 %v405
    %v453 = vunpack.c.h.b16 %v405
    %v454 = vunpack.c.l.b16 %v406
    %v455 = vunpack.c.h.b16 %v406
    %v456 = vunpack.c.l.b16 %v407
    %v457 = vunpack.c.h.b16 %v407
    %v458 = vunpack.c.l.b16 %v408
    %v459 = vunpack.c.h.b16 %v408
    %v460 = vunpack.c.l.b16 %v409
    %v461 = vunpack.c.h.b16 %v409
    %v462 = vunpack.c.l.b16 %v410
    %v463 = vunpack.c.h.b16 %v410
    %v464 = vunpack.c.l.b16 %v411
    %v465 = vunpack.c.h.b16 %v411
    %v466 = vpack.c.b16 %v436, %v434
    %v467 = vpack.c.b16 %v437, %v435
    %v468 = vpack.c.b16 %v440, %v438
    %v469 = vpack.c.b16 %v441, %v439
    %v470 = vpack.c.b16 %v444, %v442
    %v471 = vpack.c.b16 %v445, %v443
    %v472 = vpack.c.b16 %v448, %v446
    %v473 = vpack.c.b16 %v449, %v447
    %v474 = vpack.c.b16 %v452, %v450
    %v475 = vpack.c.b16 %v453, %v451
    %v476 = vpack.c.b16 %v456, %v454
    %v477 = vpack.c.b16 %v457, %v455
    %v478 = vpack.c.b16 %v460, %v458
    %v479 = vpack.c.b16 %v461, %v459
    %v480 = vpack.c.b16 %v464, %v462
    %v481 = vpack.c.b16 %v465, %v463
    %498 = vmatpush.bf16.msra.mxu0 %v480
    %499 = vmatpush.bf16.msra.mxu0 %v478
    %500 = vmatpush.bf16.msra.mxu0 %v476
    %501 = vmatpush.bf16.msra.mxu0 %v474
    %502 = vmatpush.bf16.msra.mxu0 %v472
    %503 = vmatpush.bf16.msra.mxu0 %v470
    %504 = vmatpush.bf16.msra.mxu0 %v468
    %505 = vmatpush.bf16.msra.mxu0 %v466
    %506 = vmatmul.bf16.gmra.mxu0 %v395
    %v507 = vpop.f32.mrf.mxu0
    %v508 = vadd.f32 %v414, %v507
    %v509 = vpop.f32.mrf.mxu0
    %v510 = vadd.f32 %v414, %v509
    %511 = vdwg.mxu0
    %512 = vmatpush.bf16.msra.mxu0 %v481
    %513 = vmatpush.bf16.msra.mxu0 %v479
    %514 = vmatpush.bf16.msra.mxu0 %v477
    %515 = vmatpush.bf16.msra.mxu0 %v475
    %516 = vmatpush.bf16.msra.mxu0 %v473
    %517 = vmatpush.bf16.msra.mxu0 %v471
    %518 = vmatpush.bf16.msra.mxu0 %v469
    %519 = vmatpush.bf16.msra.mxu0 %v467
    %520 = vmatmul.bf16.gmra.mxu0 %v395
    %v521 = vpop.f32.mrf.mxu0
    %v522 = vadd.f32 %v415, %v521
    %v523 = vpop.f32.mrf.mxu0
    %v524 = vadd.f32 %v415, %v523
    %525 = vdwg.mxu0
    %526 = vst [vmem:[%s9] sm:$0xff] %v508
    %527 = vst [vmem:[%s9 + $0x8] sm:$0xff] %v522
    %528 = vst [vmem:[%s9 + $0x10] sm:$0xff] %v510
    %529 = vst [vmem:[%s9 + $0x18] sm:$0xff] %v524
    // Predicated region
    $region50: #{forward.1} parent=1 // pred_check
      _
    $region51: #{forward.1} parent=1 // pred_check_branch
      %531 = sbr.rel (0) target = $region53
    $region52: #{forward.1} parent=1 // pred_region
      _
    $region53: #{forward.1} parent=1 // pred_fallthru
      _
    // Predicated region
    $region54: #{forward.1} parent=1 // pred_check
      _
    $region55: #{forward.1} parent=1 // pred_check_branch
      %533 = sbr.rel (0) target = $region57
    $region56: #{forward.1} parent=1 // pred_region
      _
    $region57: #{forward.1} parent=1 // pred_fallthru
      _
    %534 = vsyncpa [#allocation3], 1
    %535 = vsyncpa [#allocation5], 1

</llo_original>
